<compile_context>
chip_gen: v5e
topology: v5e:2x2
jax: 0.10.0
libtpu: 0.0.40
codegen_flags: <defaults>
</compile_context>

<pallas_src>
import functools

import jax
import jax.numpy as jnp
from jax.experimental import pallas as pl
from jax.experimental.pallas import tpu as pltpu  # noqa: F401  (TPU backend)

BN_EPS = 1e-5
PAD = 128  # lane width; in/hidden/out feature dims are zero-padded to this


# --------------------------------------------------------------------------- #
# Kernel
# --------------------------------------------------------------------------- #
def _conditional_net_kernel(x_ref, w_ref, vec_ref, out_ref, *, n_real):
    """Fused 3-layer MLP (single grid point, whole problem resident in VMEM).

    x_ref   : (B, PAD)        input, zero-padded on the feature axis
    w_ref   : (3*PAD, PAD)    row-concatenated zero-padded [W1; W2; W3], (in, out) layout
    vec_ref : (8, PAD)        packed rows: b1, g1, be1, b2, g2, be2, b3, <zeros>
    out_ref : (B, PAD)        lane-dense output slab (real out_dim sliced outside)
    n_real  : int             B * in_dim -- real element count for the global norm
    """
    x = x_ref[...]  # f32

    # ---- global input normalization: (x - mean) / std  (torch.std -> unbiased, N-1) ----
    # Padded columns are exactly zero, so sum / sum-of-squares over the padded slab equal
    # the sums over the real elements; divide by the REAL count n_real.
    s = jnp.sum(x)
    ssq = jnp.sum(x * x)
    mean = s * (1.0 / n_real)
    var_unb = (ssq - n_real * mean * mean) * (1.0 / (n_real - 1))
    var_unb = jnp.maximum(var_unb, 1e-12)          # guard single-pass cancellation
    x = (x - mean) * jax.lax.rsqrt(var_unb)
    # NOTE: padded columns now hold (0-mean)*inv_std, but W1's padded rows are zero,
    # so they never reach the hidden layer.

    # one vreg-slab load; slice rows of the VALUE (not 7 separate sub-vreg ref reads)
    vecs = vec_ref[...]
    b1, g1, be1 = vecs[0:1, :], vecs[1:2, :], vecs[2:3, :]
    b2, g2, be2 = vecs[3:4, :], vecs[4:5, :], vecs[5:6, :]
    b3 = vecs[6:7, :]

    # (8,128)-aligned static views into the packed weight slab
    w1 = w_ref[0 * PAD:1 * PAD, :]
    w2 = w_ref[1 * PAD:2 * PAD, :]
    w3 = w_ref[2 * PAD:3 * PAD, :]

    def linear_bn_relu(h, w, b, g, be):
        # Linear (weights pre-transposed to (in, out) -> lane-dense h @ W)
        h = jnp.dot(h, w, preferred_element_type=jnp.float32) + b
        # BatchNorm1d training-mode stats: batch mean + *biased* variance, single pass
        inv_b = 1.0 / h.shape[0]
        mu = jnp.sum(h, axis=0, keepdims=True) * inv_b
        msq = jnp.sum(h * h, axis=0, keepdims=True) * inv_b
        v = jnp.maximum(msq - mu * mu, 0.0)
        # fold BN affine into one FMA:  g*(h-mu)*rsqrt(v+eps) + be  ==  h*scale + shift
        scale = g * jax.lax.rsqrt(v + BN_EPS)
        shift = be - mu * scale
        h = h * scale + shift
        return jnp.maximum(h, 0.0)                 # ReLU

    h = linear_bn_relu(x, w1, b1, g1, be1)
    h = linear_bn_relu(h, w2, b2, g2, be2)

    # final Linear (no BN / activation); padded columns of W3/b3 are exactly zero
    out = jnp.dot(h, w3, preferred_element_type=jnp.float32) + b3
    out_ref[...] = out.astype(out_ref.dtype)


def _full_spec(shape):
    # single grid point -> full-array block resident in VMEM
    return pl.BlockSpec(shape, lambda: tuple(0 for _ in shape))


# --------------------------------------------------------------------------- #
# Parameter packing (HOISTED: run once per parameter set, reuse across calls)
# --------------------------------------------------------------------------- #
def _pad_lane(v, width=PAD):
    v = v.astype(jnp.float32)
    return jnp.pad(v, (0, width - v.shape[0]))


def pack_params(params, in_dim):
    """Build the (3*PAD, PAD) weight slab and (8, PAD) vector slab once."""
    h1 = params["w1"].shape[0]
    h2 = params["w2"].shape[0]
    out_dim = params["w3"].shape[0]
    assert in_dim <= PAD and h1 <= PAD and h2 <= PAD and out_dim <= PAD

    w1p = jnp.zeros((PAD, PAD), jnp.float32).at[:in_dim, :h1].set(params["w1"].T)
    w2p = jnp.zeros((PAD, PAD), jnp.float32).at[:h1, :h2].set(params["w2"].T)
    w3p = jnp.zeros((PAD, PAD), jnp.float32).at[:h2, :out_dim].set(params["w3"].T)
    w_pack = jnp.concatenate([w1p, w2p, w3p], axis=0)            # (3*PAD, PAD)

    vec_pack = jnp.stack([                                        # (8, PAD): one DMA
        _pad_lane(params["b1"]), _pad_lane(params["g1"]), _pad_lane(params["be1"]),
        _pad_lane(params["b2"]), _pad_lane(params["g2"]), _pad_lane(params["be2"]),
        _pad_lane(params["b3"]), jnp.zeros((PAD,), jnp.float32)], axis=0)
    return w_pack, vec_pack, out_dim


# --------------------------------------------------------------------------- #
# Forward (thin jitted wrapper: pad x, launch kernel, slice real out_dim)
# --------------------------------------------------------------------------- #
@functools.partial(jax.jit, static_argnames=("in_dim", "out_dim"))
def conditional_net_forward(x, w_pack, vec_pack, *, in_dim, out_dim):
    """x: (B, in_dim) f32; w_pack/vec_pack from pack_params. Returns (B, out_dim) f32."""
    B = x.shape[0]
    x_pad = jnp.zeros((B, PAD), jnp.float32).at[:, :in_dim].set(x.astype(jnp.float32))

    flops = 2 * B * 3 * PAD * PAD
    bytes_accessed = 4 * (B * PAD + w_pack.size + vec_pack.size + B * PAD)
    cost = pl.CostEstimate(flops=flops, transcendentals=2 * PAD + 1,
                           bytes_accessed=bytes_accessed)

    out_pad = pl.pallas_call(
        functools.partial(_conditional_net_kernel, n_real=B * in_dim),
        out_shape=jax.ShapeDtypeStruct((B, PAD), jnp.float32),
        in_specs=[_full_spec((B, PAD)), _full_spec(w_pack.shape),
                  _full_spec(vec_pack.shape)],
        out_specs=_full_spec((B, PAD)),
        cost_estimate=cost,
    )(x_pad, w_pack, vec_pack)

    # padded weight/bias columns are exactly zero, so this slice is bit-exact
    return out_pad[:, :out_dim]


# --------------------------------------------------------------------------- #
# Pure-jnp reference + deterministic init (for the self-check in __main__)
# --------------------------------------------------------------------------- #
def _reference_forward(x, params):
    hp = jax.lax.Precision.HIGHEST
    mean = jnp.mean(x)
    std = jnp.std(x, ddof=1)
    h = (x - mean) / std
    for i in (1, 2):
        h = jnp.dot(h, params[f"w{i}"].T, precision=hp) + params[f"b{i}"]
        mu = jnp.mean(h, axis=0)
        v = jnp.mean((h - mu) ** 2, axis=0)
        h = params[f"g{i}"] * (h - mu) / jnp.sqrt(v + BN_EPS) + params[f"be{i}"]
        h = jnp.maximum(h, 0.0)
    return jnp.dot(h, params["w3"].T, precision=hp) + params["b3"]


def init_params(key, layer_specs):
    """Deterministic init mimicking PyTorch defaults (uniform +-1/sqrt(fan_in))."""
    params = {}
    keys = jax.random.split(key, 2 * len(layer_specs))
    for i, (fan_in, fan_out, _bias) in enumerate(layer_specs, start=1):
        bound = 1.0 / jnp.sqrt(jnp.float32(fan_in))
        params[f"w{i}"] = jax.random.uniform(
            keys[2 * (i - 1)], (fan_out, fan_in), jnp.float32, -bound, bound)
        params[f"b{i}"] = jax.random.uniform(
            keys[2 * (i - 1) + 1], (fan_out,), jnp.float32, -bound, bound)
        if i != len(layer_specs):  # BatchNorm affine params (gamma=1, beta=0)
            params[f"g{i}"] = jnp.ones((fan_out,), jnp.float32)
            params[f"be{i}"] = jnp.zeros((fan_out,), jnp.float32)
    return params


if __name__ == "__main__":
    # layer_specs as in Conditional_Net.__init__: (in, out, bias)
    layer_specs = [(16, 32, True), (32, 32, True), (32, 8, True)]
    in_dim, out_dim = layer_specs[0][0], layer_specs[-1][1]
    B = 64  # amortize launch overhead / fill more MXU rows (perf review)

    key = jax.random.PRNGKey(0)
    k_x, k_p = jax.random.split(key)
    x = jax.random.normal(k_x, (B, in_dim), jnp.float32)
    params = init_params(k_p, layer_specs)

    # Hoisted packing: done ONCE per parameter set, reused across forward calls.
    w_pack, vec_pack, packed_out_dim = pack_params(params, in_dim)
    w_pack, vec_pack = jax.block_until_ready((w_pack, vec_pack))

    out = conditional_net_forward(x, w_pack, vec_pack, in_dim=in_dim,
                                  out_dim=packed_out_dim)
    out = jax.block_until_ready(out)
    assert out.shape == (B, out_dim)

    ref = _reference_forward(x, params)
    max_err = jnp.max(jnp.abs(out - ref))
    assert jnp.allclose(out, ref, rtol=5e-3, atol=5e-3), f"max abs err {max_err}"

    print("KERNEL_OK")
</pallas_src>

<mosaic_0001>
module attributes {stable_mosaic.version = 11 : i64} {
  func.func @_conditional_net_kernel(%arg0: memref<64x128xf32, #tpu.memory_space<vmem>>, %arg1: memref<384x128xf32, #tpu.memory_space<vmem>>, %arg2: memref<8x128xf32, #tpu.memory_space<vmem>>, %arg3: memref<64x128xf32, #tpu.memory_space<vmem>>) attributes {dimension_semantics = [], scalar_prefetch = 0 : i64, scratch_operands = 0 : i64, tpu.core_type = #tpu.core_type<tc>} {
    %c0 = arith.constant 0 : index
    %c0_0 = arith.constant 0 : index
    %0 = vector.load %arg0[%c0, %c0_0] : memref<64x128xf32, #tpu.memory_space<vmem>>, vector<64x128xf32>
    %1 = vector.shape_cast %0 : vector<64x128xf32> to vector<1x64x128xf32>
    %cst = arith.constant dense<0.000000e+00> : vector<1xf32>
    %2 = vector.multi_reduction <add>, %1, %cst [1, 2] : vector<1x64x128xf32> to vector<1xf32>
    %3 = vector.shape_cast %2 : vector<1xf32> to vector<1x1x1xf32>
    %4 = vector.extract %3[0, 0, 0] : f32 from vector<1x1x1xf32>
    %5 = arith.mulf %0, %0 : vector<64x128xf32>
    %6 = vector.shape_cast %5 : vector<64x128xf32> to vector<1x64x128xf32>
    %cst_1 = arith.constant dense<0.000000e+00> : vector<1xf32>
    %7 = vector.multi_reduction <add>, %6, %cst_1 [1, 2] : vector<1x64x128xf32> to vector<1xf32>
    %8 = vector.shape_cast %7 : vector<1xf32> to vector<1x1x1xf32>
    %9 = vector.extract %8[0, 0, 0] : f32 from vector<1x1x1xf32>
    %cst_2 = arith.constant 9.765625E-4 : f32
    %10 = arith.mulf %4, %cst_2 : f32
    %cst_3 = arith.constant 1.024000e+03 : f32
    %11 = arith.mulf %cst_3, %10 : f32
    %12 = arith.mulf %11, %10 : f32
    %13 = arith.subf %9, %12 : f32
    %cst_4 = arith.constant 9.77517105E-4 : f32
    %14 = arith.mulf %13, %cst_4 : f32
    %cst_5 = arith.constant 9.99999996E-13 : f32
    %15 = arith.maximumf %14, %cst_5 : f32
    %16 = vector.broadcast %10 : f32 to vector<64x128xf32>
    %17 = arith.subf %0, %16 : vector<64x128xf32>
    %18 = math.rsqrt %15 : f32
    %19 = vector.broadcast %18 : f32 to vector<64x128xf32>
    %20 = arith.mulf %17, %19 : vector<64x128xf32>
    %c0_6 = arith.constant 0 : index
    %c0_7 = arith.constant 0 : index
    %21 = vector.load %arg2[%c0_6, %c0_7] : memref<8x128xf32, #tpu.memory_space<vmem>>, vector<8x128xf32>
    %22 = vector.extract_strided_slice %21 {offsets = [0, 0], sizes = [1, 128], strides = [1, 1]} : vector<8x128xf32> to vector<1x128xf32>
    %23 = vector.extract_strided_slice %21 {offsets = [1, 0], sizes = [1, 128], strides = [1, 1]} : vector<8x128xf32> to vector<1x128xf32>
    %24 = vector.extract_strided_slice %21 {offsets = [2, 0], sizes = [1, 128], strides = [1, 1]} : vector<8x128xf32> to vector<1x128xf32>
    %25 = vector.extract_strided_slice %21 {offsets = [3, 0], sizes = [1, 128], strides = [1, 1]} : vector<8x128xf32> to vector<1x128xf32>
    %26 = vector.extract_strided_slice %21 {offsets = [4, 0], sizes = [1, 128], strides = [1, 1]} : vector<8x128xf32> to vector<1x128xf32>
    %27 = vector.extract_strided_slice %21 {offsets = [5, 0], sizes = [1, 128], strides = [1, 1]} : vector<8x128xf32> to vector<1x128xf32>
    %28 = vector.extract_strided_slice %21 {offsets = [6, 0], sizes = [1, 128], strides = [1, 1]} : vector<8x128xf32> to vector<1x128xf32>
    %c0_8 = arith.constant 0 : index
    %c0_9 = arith.constant 0 : index
    %29 = vector.load %arg1[%c0_8, %c0_9] : memref<384x128xf32, #tpu.memory_space<vmem>>, vector<128x128xf32>
    %c128 = arith.constant 128 : index
    %c0_10 = arith.constant 0 : index
    %30 = vector.load %arg1[%c128, %c0_10] : memref<384x128xf32, #tpu.memory_space<vmem>>, vector<128x128xf32>
    %c256 = arith.constant 256 : index
    %c0_11 = arith.constant 0 : index
    %31 = vector.load %arg1[%c256, %c0_11] : memref<384x128xf32, #tpu.memory_space<vmem>>, vector<128x128xf32>
    %cst_12 = arith.constant dense<0.000000e+00> : vector<64x128xf32>
    %32 = tpu.matmul %20, %29, %cst_12 {dimension_numbers = #tpu.dot_dimension_numbers<[1], [0], [0], [1], [0, 0, 1, 1], [], []>} : vector<64x128xf32>, vector<128x128xf32>, vector<64x128xf32> -> vector<64x128xf32>
    %33 = vector.broadcast %22 : vector<1x128xf32> to vector<64x128xf32>
    %34 = arith.addf %32, %33 : vector<64x128xf32>
    %cst_13 = arith.constant dense<0.000000e+00> : vector<128xf32>
    %35 = vector.multi_reduction <add>, %34, %cst_13 [0] : vector<64x128xf32> to vector<128xf32>
    %36 = vector.shape_cast %35 : vector<128xf32> to vector<1x128xf32>
    %cst_14 = arith.constant 1.562500e-02 : f32
    %37 = vector.broadcast %cst_14 : f32 to vector<1x128xf32>
    %38 = arith.mulf %36, %37 : vector<1x128xf32>
    %39 = arith.mulf %34, %34 : vector<64x128xf32>
    %cst_15 = arith.constant dense<0.000000e+00> : vector<128xf32>
    %40 = vector.multi_reduction <add>, %39, %cst_15 [0] : vector<64x128xf32> to vector<128xf32>
    %41 = vector.shape_cast %40 : vector<128xf32> to vector<1x128xf32>
    %cst_16 = arith.constant 1.562500e-02 : f32
    %42 = vector.broadcast %cst_16 : f32 to vector<1x128xf32>
    %43 = arith.mulf %41, %42 : vector<1x128xf32>
    %44 = arith.mulf %38, %38 : vector<1x128xf32>
    %45 = arith.subf %43, %44 : vector<1x128xf32>
    %cst_17 = arith.constant 0.000000e+00 : f32
    %46 = vector.broadcast %cst_17 : f32 to vector<1x128xf32>
    %47 = arith.maximumf %45, %46 : vector<1x128xf32>
    %cst_18 = arith.constant 9.99999974E-6 : f32
    %48 = vector.broadcast %cst_18 : f32 to vector<1x128xf32>
    %49 = arith.addf %47, %48 : vector<1x128xf32>
    %50 = math.rsqrt %49 : vector<1x128xf32>
    %51 = arith.mulf %23, %50 : vector<1x128xf32>
    %52 = arith.mulf %38, %51 : vector<1x128xf32>
    %53 = arith.subf %24, %52 : vector<1x128xf32>
    %54 = vector.broadcast %51 : vector<1x128xf32> to vector<64x128xf32>
    %55 = arith.mulf %34, %54 : vector<64x128xf32>
    %56 = vector.broadcast %53 : vector<1x128xf32> to vector<64x128xf32>
    %57 = arith.addf %55, %56 : vector<64x128xf32>
    %cst_19 = arith.constant 0.000000e+00 : f32
    %58 = vector.broadcast %cst_19 : f32 to vector<64x128xf32>
    %59 = arith.maximumf %57, %58 : vector<64x128xf32>
    %cst_20 = arith.constant dense<0.000000e+00> : vector<64x128xf32>
    %60 = tpu.matmul %59, %30, %cst_20 {dimension_numbers = #tpu.dot_dimension_numbers<[1], [0], [0], [1], [0, 0, 1, 1], [], []>} : vector<64x128xf32>, vector<128x128xf32>, vector<64x128xf32> -> vector<64x128xf32>
    %61 = vector.broadcast %25 : vector<1x128xf32> to vector<64x128xf32>
    %62 = arith.addf %60, %61 : vector<64x128xf32>
    %cst_21 = arith.constant dense<0.000000e+00> : vector<128xf32>
    %63 = vector.multi_reduction <add>, %62, %cst_21 [0] : vector<64x128xf32> to vector<128xf32>
    %64 = vector.shape_cast %63 : vector<128xf32> to vector<1x128xf32>
    %cst_22 = arith.constant 1.562500e-02 : f32
    %65 = vector.broadcast %cst_22 : f32 to vector<1x128xf32>
    %66 = arith.mulf %64, %65 : vector<1x128xf32>
    %67 = arith.mulf %62, %62 : vector<64x128xf32>
    %cst_23 = arith.constant dense<0.000000e+00> : vector<128xf32>
    %68 = vector.multi_reduction <add>, %67, %cst_23 [0] : vector<64x128xf32> to vector<128xf32>
    %69 = vector.shape_cast %68 : vector<128xf32> to vector<1x128xf32>
    %cst_24 = arith.constant 1.562500e-02 : f32
    %70 = vector.broadcast %cst_24 : f32 to vector<1x128xf32>
    %71 = arith.mulf %69, %70 : vector<1x128xf32>
    %72 = arith.mulf %66, %66 : vector<1x128xf32>
    %73 = arith.subf %71, %72 : vector<1x128xf32>
    %cst_25 = arith.constant 0.000000e+00 : f32
    %74 = vector.broadcast %cst_25 : f32 to vector<1x128xf32>
    %75 = arith.maximumf %73, %74 : vector<1x128xf32>
    %cst_26 = arith.constant 9.99999974E-6 : f32
    %76 = vector.broadcast %cst_26 : f32 to vector<1x128xf32>
    %77 = arith.addf %75, %76 : vector<1x128xf32>
    %78 = math.rsqrt %77 : vector<1x128xf32>
    %79 = arith.mulf %26, %78 : vector<1x128xf32>
    %80 = arith.mulf %66, %79 : vector<1x128xf32>
    %81 = arith.subf %27, %80 : vector<1x128xf32>
    %82 = vector.broadcast %79 : vector<1x128xf32> to vector<64x128xf32>
    %83 = arith.mulf %62, %82 : vector<64x128xf32>
    %84 = vector.broadcast %81 : vector<1x128xf32> to vector<64x128xf32>
    %85 = arith.addf %83, %84 : vector<64x128xf32>
    %cst_27 = arith.constant 0.000000e+00 : f32
    %86 = vector.broadcast %cst_27 : f32 to vector<64x128xf32>
    %87 = arith.maximumf %85, %86 : vector<64x128xf32>
    %cst_28 = arith.constant dense<0.000000e+00> : vector<64x128xf32>
    %88 = tpu.matmul %87, %31, %cst_28 {dimension_numbers = #tpu.dot_dimension_numbers<[1], [0], [0], [1], [0, 0, 1, 1], [], []>} : vector<64x128xf32>, vector<128x128xf32>, vector<64x128xf32> -> vector<64x128xf32>
    %89 = vector.broadcast %28 : vector<1x128xf32> to vector<64x128xf32>
    %90 = arith.addf %88, %89 : vector<64x128xf32>
    %c0_29 = arith.constant 0 : index
    %c0_30 = arith.constant 0 : index
    %91 = vector.load %arg3[%c0_29, %c0_30] : memref<64x128xf32, #tpu.memory_space<vmem>>, vector<64x128xf32>
    tpu.vector_store %arg3[%c0_29, %c0_30], %90 {strides = array<i32>} : memref<64x128xf32, #tpu.memory_space<vmem>>, vector<64x128xf32>,
    return
  }
}

</mosaic_0001>

<llo_original>
// kernel: conditional_net_forward.1
$region0: #{conditional_net_forward.1}
  #allocation0 [shape = 'u32[]', space=smem, size = 0x4, offset = 0x4, fixed_abs, tag = 'smem constant byte address 0x4 - core index']
  #allocation1 [shape = 'u32[72,128]{1,0:T(1,128)}', space=vmem, size = 0x9000, scoped, tag = 'internal scratch']
  %s0 = inlined_call_operand.vmem [shape: f32[64,128], index: 0, kind: input, shape index: {}]
  %s1 = inlined_call_operand.hbm [shape: f32[384,128], index: 1, kind: input, shape index: {}]
  %s2 = inlined_call_operand.vmem [shape: f32[8,128], index: 2, kind: input, shape index: {}]
  %s3 = inlined_call_operand.vmem [shape: f32[64,128], index: 3, kind: output, shape index: {}]
  %s4 = sld [smem:[#allocation0]]
  $region26: #{conditional_net_forward.1} parent=0
    _
  %s6 = ssub.s32 1, %s4
  %s7 = scalar_select 0, %s6, %s4
  $region1: #{conditional_net_forward.1} parent=0
    #allocation2 [shape = 'u8[196608]{0}', space=vmem, size = 0x30000, scoped, tag = 'input window, operand 1, single buffered']
    #allocation3 [shape = 's32[1]{0}', space=sflag, size = 0x4, scoped, tag = 'scoped memory for conditional_net_forward.1']
    %8 = vsyncpa [#allocation3], 0
    // Predicated region
    $region2: #{conditional_net_forward.1} parent=1 // pred_check
      _
    $region3: #{conditional_net_forward.1} parent=1 // pred_check_branch
      %10 = sbr.rel (0) target = $region5
    $region4: #{conditional_net_forward.1} parent=1 // pred_region
      _
    $region5: #{conditional_net_forward.1} parent=1 // pred_fallthru
      _
    // Predicated region
    $region6: #{conditional_net_forward.1} parent=1 // pred_check
      _
    $region7: #{conditional_net_forward.1} parent=1 // pred_check_branch
      %12 = sbr.rel (0) target = $region9
    $region8: #{conditional_net_forward.1} parent=1 // pred_region
      %14 = vsyncadd [#allocation3], 0
      %s15 = sshll.u32 %s1, 4
      %s16 = int_to_ptr.hbm [resolvable:$true] %s15
      %s17 = sshll.u32 [#allocation2], 4
      %s18 = int_to_ptr.vmem [resolvable:$true] %s17
      %23 = dma.hbm_to_vmem [thread:$0]  %s16, 6144, %s18, [#allocation3], 128, 128, 8
    $region9: #{conditional_net_forward.1} parent=1 // pred_fallthru
      _
    // Predicated region
    $region10: #{conditional_net_forward.1} parent=1 // pred_check
      _
    $region11: #{conditional_net_forward.1} parent=1 // pred_check_branch
      %25 = sbr.rel (0) target = $region13
    $region12: #{conditional_net_forward.1} parent=1 // pred_region
      _
    $region13: #{conditional_net_forward.1} parent=1 // pred_fallthru
      _
    // Predicated region
    $region14: #{conditional_net_forward.1} parent=1 // pred_check
      _
    $region15: #{conditional_net_forward.1} parent=1 // pred_check_branch
      %27 = sbr.rel (0) target = $region17
    $region16: #{conditional_net_forward.1} parent=1 // pred_region
      %29 = dma.done [#allocation3], 6144
    $region17: #{conditional_net_forward.1} parent=1 // pred_fallthru
      _
    %v30 = vld [vmem:[%s0] sm:$0xff]
    %v31 = vld [vmem:[%s0 + $0x8] sm:$0xff]
    %v32 = vld [vmem:[%s0 + $0x10] sm:$0xff]
    %v33 = vld [vmem:[%s0 + $0x18] sm:$0xff]
    %v34 = vld [vmem:[%s0 + $0x20] sm:$0xff]
    %v35 = vld [vmem:[%s0 + $0x28] sm:$0xff]
    %v36 = vld [vmem:[%s0 + $0x30] sm:$0xff]
    %v37 = vld [vmem:[%s0 + $0x38] sm:$0xff]
    %v38 = vadd.f32 %v30, %v31
    %v39 = vadd.f32 %v38, %v32
    %v40 = vadd.f32 %v39, %v33
    %v41 = vadd.f32 %v40, %v34
    %v42 = vadd.f32 %v41, %v35
    %v43 = vadd.f32 %v42, %v36
    %v44 = vadd.f32 %v43, %v37
    %45 = vadd.xlane.f32.xlu0 %v44
    %v46 = vpop.xlane.xlu0 %45
    %v47 = vrot.slane %v46, 4
    %v48 = vadd.f32 %v46, %v47
    %v49 = vrot.slane %v48, 2
    %v50 = vadd.f32 %v48, %v49
    %v51 = vrot.slane %v50, 1
    %v52 = vadd.f32 %v50, %v51
    %s53 = vtos %v52
    %v54 = vmul.f32 %v30, %v30
    %v55 = vmul.f32 %v31, %v31
    %v56 = vmul.f32 %v32, %v32
    %v57 = vmul.f32 %v33, %v33
    %v58 = vmul.f32 %v34, %v34
    %v59 = vmul.f32 %v35, %v35
    %v60 = vmul.f32 %v36, %v36
    %v61 = vmul.f32 %v37, %v37
    %v62 = vadd.f32 %v54, %v55
    %v63 = vadd.f32 %v62, %v56
    %v64 = vadd.f32 %v63, %v57
    %v65 = vadd.f32 %v64, %v58
    %v66 = vadd.f32 %v65, %v59
    %v67 = vadd.f32 %v66, %v60
    %v68 = vadd.f32 %v67, %v61
    %69 = vadd.xlane.f32.xlu0 %v68
    %v70 = vpop.xlane.xlu0 %69
    %v71 = vrot.slane %v70, 4
    %v72 = vadd.f32 %v70, %v71
    %v73 = vrot.slane %v72, 2
    %v74 = vadd.f32 %v72, %v73
    %v75 = vrot.slane %v74, 1
    %v76 = vadd.f32 %v74, %v75
    %s77 = vtos %v76
    %s78 = smul.f32 %s53, 0.0009765625
    %s79 = smul.f32 %s78, 1024.0
    %s80 = smul.f32 %s79, %s78
    %s81 = ssub.f32 %s77, %s80
    %s82 = smul.f32 %s81, 0.0009775171
    %s83 = smax.f32 %s82, 1e-12
    %v84 = vstv %s78
    %v85 = vsub.f32 %v30, %v84
    %v86 = vsub.f32 %v31, %v84
    %v87 = vsub.f32 %v32, %v84
    %v88 = vsub.f32 %v33, %v84
    %v89 = vsub.f32 %v34, %v84
    %v90 = vsub.f32 %v35, %v84
    %v91 = vsub.f32 %v36, %v84
    %v92 = vsub.f32 %v37, %v84
    %v93 = vstv %s83
    %v94 = vrsqrt.pop %v93
    %v95 = vmul.f32 %v94, %v93
    %v96 = vmul.f32 %v95, %v94
    %v97 = vmul.f32 0.5, %v96
    %v98 = vsub.f32 1.5, %v97
    %v99 = vmul.f32 %v94, %v98
    %vm100 = vweird.f32 %v93
    %vm101 = vweird.f32 %v94
    %vm102 = vmor %vm100, %vm101
    %v103 = vsel %vm102, %v94, %v99
    %s104 = vtos %v103
    %v105 = vstv %s104
    %v106 = vmul.f32 %v85, %v105
    %v107 = vmul.f32 %v86, %v105
    %v108 = vmul.f32 %v87, %v105
    %v109 = vmul.f32 %v88, %v105
    %v110 = vmul.f32 %v89, %v105
    %v111 = vmul.f32 %v90, %v105
    %v112 = vmul.f32 %v91, %v105
    %v113 = vmul.f32 %v92, %v105
    %v114 = vld [vmem:[%s2] sm:$0xff]
    %v115 = vld [vmem:[#allocation2] sm:$0xff]
    %v116 = vld [vmem:[#allocation2 + $0x8] sm:$0xff]
    %v117 = vld [vmem:[#allocation2 + $0x10] sm:$0xff]
    %v118 = vld [vmem:[#allocation2 + $0x18] sm:$0xff]
    %v119 = vld [vmem:[#allocation2 + $0x20] sm:$0xff]
    %v120 = vld [vmem:[#allocation2 + $0x28] sm:$0xff]
    %v121 = vld [vmem:[#allocation2 + $0x30] sm:$0xff]
    %v122 = vld [vmem:[#allocation2 + $0x38] sm:$0xff]
    %v123 = vld [vmem:[#allocation2 + $0x40] sm:$0xff]
    %v124 = vld [vmem:[#allocation2 + $0x48] sm:$0xff]
    %v125 = vld [vmem:[#allocation2 + $0x50] sm:$0xff]
    %v126 = vld [vmem:[#allocation2 + $0x58] sm:$0xff]
    %v127 = vld [vmem:[#allocation2 + $0x60] sm:$0xff]
    %v128 = vld [vmem:[#allocation2 + $0x68] sm:$0xff]
    %v129 = vld [vmem:[#allocation2 + $0x70] sm:$0xff]
    %v130 = vld [vmem:[#allocation2 + $0x78] sm:$0xff]
    %v131 = vld [vmem:[#allocation2 + $0x80] sm:$0xff]
    %v132 = vld [vmem:[#allocation2 + $0x88] sm:$0xff]
    %v133 = vld [vmem:[#allocation2 + $0x90] sm:$0xff]
    %v134 = vld [vmem:[#allocation2 + $0x98] sm:$0xff]
    %v135 = vld [vmem:[#allocation2 + $0xa0] sm:$0xff]
    %v136 = vld [vmem:[#allocation2 + $0xa8] sm:$0xff]
    %v137 = vld [vmem:[#allocation2 + $0xb0] sm:$0xff]
    %v138 = vld [vmem:[#allocation2 + $0xb8] sm:$0xff]
    %v139 = vld [vmem:[#allocation2 + $0xc0] sm:$0xff]
    %v140 = vld [vmem:[#allocation2 + $0xc8] sm:$0xff]
    %v141 = vld [vmem:[#allocation2 + $0xd0] sm:$0xff]
    %v142 = vld [vmem:[#allocation2 + $0xd8] sm:$0xff]
    %v143 = vld [vmem:[#allocation2 + $0xe0] sm:$0xff]
    %v144 = vld [vmem:[#allocation2 + $0xe8] sm:$0xff]
    %v145 = vld [vmem:[#allocation2 + $0xf0] sm:$0xff]
    %v146 = vld [vmem:[#allocation2 + $0xf8] sm:$0xff]
    %v147 = vld [vmem:[#allocation2 + $0x100] sm:$0xff]
    %v148 = vld [vmem:[#allocation2 + $0x108] sm:$0xff]
    %v149 = vld [vmem:[#allocation2 + $0x110] sm:$0xff]
    %v150 = vld [vmem:[#allocation2 + $0x118] sm:$0xff]
    %v151 = vld [vmem:[#allocation2 + $0x120] sm:$0xff]
    %v152 = vld [vmem:[#allocation2 + $0x128] sm:$0xff]
    %v153 = vld [vmem:[#allocation2 + $0x130] sm:$0xff]
    %v154 = vld [vmem:[#allocation2 + $0x138] sm:$0xff]
    %v155 = vld [vmem:[#allocation2 + $0x140] sm:$0xff]
    %v156 = vld [vmem:[#allocation2 + $0x148] sm:$0xff]
    %v157 = vld [vmem:[#allocation2 + $0x150] sm:$0xff]
    %v158 = vld [vmem:[#allocation2 + $0x158] sm:$0xff]
    %v159 = vld [vmem:[#allocation2 + $0x160] sm:$0xff]
    %v160 = vld [vmem:[#allocation2 + $0x168] sm:$0xff]
    %v161 = vld [vmem:[#allocation2 + $0x170] sm:$0xff]
    %v162 = vld [vmem:[#allocation2 + $0x178] sm:$0xff]
    %v163 = vperm.slane %v114, 0
    %164 = vmatpush.msra.mxu0 %v130
    %165 = vmatpush.msra.mxu0 %v129
    %166 = vmatpush.msra.mxu0 %v128
    %167 = vmatpush.msra.mxu0 %v127
    %168 = vmatpush.msra.mxu0 %v126
    %169 = vmatpush.msra.mxu0 %v125
    %170 = vmatpush.msra.mxu0 %v124
    %171 = vmatpush.msra.mxu0 %v123
    %172 = vmatpush.msra.mxu0 %v122
    %173 = vmatpush.msra.mxu0 %v121
    %174 = vmatpush.msra.mxu0 %v120
    %175 = vmatpush.msra.mxu0 %v119
    %176 = vmatpush.msra.mxu0 %v118
    %177 = vmatpush.msra.mxu0 %v117
    %178 = vmatpush.msra.mxu0 %v116
    %179 = vmatpush.msra.mxu0 %v115
    %180 = vmatmul.f32.gmra.mxu0 %v106
    %v181 = vpop.f32.mrf.mxu0
    %v182 = vadd.f32 %v163, %v181
    %183 = vmatmul.f32.gmra.mxu0 %v107
    %v184 = vpop.f32.mrf.mxu0
    %v185 = vadd.f32 %v163, %v184
    %186 = vmatmul.f32.gmra.mxu0 %v108
    %v187 = vpop.f32.mrf.mxu0
    %v188 = vadd.f32 %v163, %v187
    %189 = vmatmul.f32.gmra.mxu0 %v109
    %v190 = vpop.f32.mrf.mxu0
    %v191 = vadd.f32 %v163, %v190
    %192 = vmatmul.f32.gmra.mxu0 %v110
    %v193 = vpop.f32.mrf.mxu0
    %v194 = vadd.f32 %v163, %v193
    %195 = vmatmul.f32.gmra.mxu0 %v111
    %v196 = vpop.f32.mrf.mxu0
    %v197 = vadd.f32 %v163, %v196
    %198 = vmatmul.f32.gmra.mxu0 %v112
    %v199 = vpop.f32.mrf.mxu0
    %v200 = vadd.f32 %v163, %v199
    %201 = vmatmul.f32.gmra.mxu0 %v113
    %v202 = vpop.f32.mrf.mxu0
    %v203 = vadd.f32 %v163, %v202
    %204 = vdwg.mxu0
    %v205 = vadd.f32 %v182, %v185
    %v206 = vadd.f32 %v205, %v188
    %v207 = vadd.f32 %v206, %v191
    %v208 = vadd.f32 %v207, %v194
    %v209 = vadd.f32 %v208, %v197
    %v210 = vadd.f32 %v209, %v200
    %v211 = vadd.f32 %v210, %v203
    %v212 = vrot.slane %v211, 4
    %v213 = vadd.f32 %v211, %v212
    %v214 = vrot.slane %v213, 2
    %v215 = vadd.f32 %v213, %v214
    %v216 = vrot.slane %v215, 1
    %v217 = vadd.f32 %v215, %v216
    %v218 = vmul.f32 %v217, 0.015625
    %v219 = vmul.f32 %v182, %v182
    %v220 = vmul.f32 %v185, %v185
    %v221 = vmul.f32 %v188, %v188
    %v222 = vmul.f32 %v191, %v191
    %v223 = vmul.f32 %v194, %v194
    %v224 = vmul.f32 %v197, %v197
    %v225 = vmul.f32 %v200, %v200
    %v226 = vmul.f32 %v203, %v203
    %v227 = vadd.f32 %v219, %v220
    %v228 = vadd.f32 %v227, %v221
    %v229 = vadd.f32 %v228, %v222
    %v230 = vadd.f32 %v229, %v223
    %v231 = vadd.f32 %v230, %v224
    %v232 = vadd.f32 %v231, %v225
    %v233 = vadd.f32 %v232, %v226
    %v234 = vrot.slane %v233, 4
    %v235 = vadd.f32 %v233, %v234
    %v236 = vrot.slane %v235, 2
    %v237 = vadd.f32 %v235, %v236
    %v238 = vrot.slane %v237, 1
    %v239 = vadd.f32 %v237, %v238
    %v240 = vmul.f32 %v239, 0.015625
    %v241 = vmul.f32 %v218, %v218
    %v242 = vsub.f32 %v240, %v241
    %v243 = vmax.f32 %v242, 0.0
    %v244 = vadd.f32 %v243, 1e-05
    %v245 = vrsqrt.pop %v244
    %v246 = vmul.f32 %v245, %v244
    %v247 = vmul.f32 %v246, %v245
    %v248 = vmul.f32 0.5, %v247
    %v249 = vsub.f32 1.5, %v248
    %v250 = vmul.f32 %v245, %v249
    %vm251 = vweird.f32 %v244
    %vm252 = vweird.f32 %v245
    %vm253 = vmor %vm251, %vm252
    %v254 = vsel %vm253, %v245, %v250
    %v255 = vmul.f32 %v114, %v254
    %v256 = vmul.f32 %v218, %v255
    %v258 = vrot.slane %v256, 7
    %v260 = vsub.f32 %v114, %v258
    %v261 = vperm.slane %v255, 1
    %v262 = vmul.f32 %v182, %v261
    %v263 = vmul.f32 %v185, %v261
    %v264 = vmul.f32 %v188, %v261
    %v265 = vmul.f32 %v191, %v261
    %v266 = vmul.f32 %v194, %v261
    %v267 = vmul.f32 %v197, %v261
    %v268 = vmul.f32 %v200, %v261
    %v269 = vmul.f32 %v203, %v261
    %v270 = vperm.slane %v260, 2
    %v271 = vadd.f32 %v262, %v270
    %v272 = vadd.f32 %v263, %v270
    %v273 = vadd.f32 %v264, %v270
    %v274 = vadd.f32 %v265, %v270
    %v275 = vadd.f32 %v266, %v270
    %v276 = vadd.f32 %v267, %v270
    %v277 = vadd.f32 %v268, %v270
    %v278 = vadd.f32 %v269, %v270
    %v279 = vmax.f32 %v271, 0.0
    %v280 = vmax.f32 %v272, 0.0
    %v281 = vmax.f32 %v273, 0.0
    %v282 = vmax.f32 %v274, 0.0
    %v283 = vmax.f32 %v275, 0.0
    %v284 = vmax.f32 %v276, 0.0
    %v285 = vmax.f32 %v277, 0.0
    %v286 = vmax.f32 %v278, 0.0
    %v287 = vperm.slane %v114, 3
    %288 = vmatpush.msra.mxu0 %v146
    %289 = vmatpush.msra.mxu0 %v145
    %290 = vmatpush.msra.mxu0 %v144
    %291 = vmatpush.msra.mxu0 %v143
    %292 = vmatpush.msra.mxu0 %v142
    %293 = vmatpush.msra.mxu0 %v141
    %294 = vmatpush.msra.mxu0 %v140
    %295 = vmatpush.msra.mxu0 %v139
    %296 = vmatpush.msra.mxu0 %v138
    %297 = vmatpush.msra.mxu0 %v137
    %298 = vmatpush.msra.mxu0 %v136
    %299 = vmatpush.msra.mxu0 %v135
    %300 = vmatpush.msra.mxu0 %v134
    %301 = vmatpush.msra.mxu0 %v133
    %302 = vmatpush.msra.mxu0 %v132
    %303 = vmatpush.msra.mxu0 %v131
    %304 = vmatmul.f32.gmra.mxu0 %v279
    %v305 = vpop.f32.mrf.mxu0
    %v306 = vadd.f32 %v287, %v305
    %307 = vmatmul.f32.gmra.mxu0 %v280
    %v308 = vpop.f32.mrf.mxu0
    %v309 = vadd.f32 %v287, %v308
    %310 = vmatmul.f32.gmra.mxu0 %v281
    %v311 = vpop.f32.mrf.mxu0
    %v312 = vadd.f32 %v287, %v311
    %313 = vmatmul.f32.gmra.mxu0 %v282
    %v314 = vpop.f32.mrf.mxu0
    %v315 = vadd.f32 %v287, %v314
    %316 = vmatmul.f32.gmra.mxu0 %v283
    %v317 = vpop.f32.mrf.mxu0
    %v318 = vadd.f32 %v287, %v317
    %319 = vmatmul.f32.gmra.mxu0 %v284
    %v320 = vpop.f32.mrf.mxu0
    %v321 = vadd.f32 %v287, %v320
    %322 = vmatmul.f32.gmra.mxu0 %v285
    %v323 = vpop.f32.mrf.mxu0
    %v324 = vadd.f32 %v287, %v323
    %325 = vmatmul.f32.gmra.mxu0 %v286
    %v326 = vpop.f32.mrf.mxu0
    %v327 = vadd.f32 %v287, %v326
    %328 = vdwg.mxu0
    %v329 = vadd.f32 %v306, %v309
    %v330 = vadd.f32 %v329, %v312
    %v331 = vadd.f32 %v330, %v315
    %v332 = vadd.f32 %v331, %v318
    %v333 = vadd.f32 %v332, %v321
    %v334 = vadd.f32 %v333, %v324
    %v335 = vadd.f32 %v334, %v327
    %v336 = vrot.slane %v335, 4
    %v337 = vadd.f32 %v335, %v336
    %v338 = vrot.slane %v337, 2
    %v339 = vadd.f32 %v337, %v338
    %v340 = vrot.slane %v339, 1
    %v341 = vadd.f32 %v339, %v340
    %v342 = vmul.f32 %v341, 0.015625
    %v343 = vmul.f32 %v306, %v306
    %v344 = vmul.f32 %v309, %v309
    %v345 = vmul.f32 %v312, %v312
    %v346 = vmul.f32 %v315, %v315
    %v347 = vmul.f32 %v318, %v318
    %v348 = vmul.f32 %v321, %v321
    %v349 = vmul.f32 %v324, %v324
    %v350 = vmul.f32 %v327, %v327
    %v351 = vadd.f32 %v343, %v344
    %v352 = vadd.f32 %v351, %v345
    %v353 = vadd.f32 %v352, %v346
    %v354 = vadd.f32 %v353, %v347
    %v355 = vadd.f32 %v354, %v348
    %v356 = vadd.f32 %v355, %v349
    %v357 = vadd.f32 %v356, %v350
    %v358 = vrot.slane %v357, 4
    %v359 = vadd.f32 %v357, %v358
    %v360 = vrot.slane %v359, 2
    %v361 = vadd.f32 %v359, %v360
    %v362 = vrot.slane %v361, 1
    %v363 = vadd.f32 %v361, %v362
    %v364 = vmul.f32 %v363, 0.015625
    %v365 = vmul.f32 %v342, %v342
    %v366 = vsub.f32 %v364, %v365
    %v367 = vmax.f32 %v366, 0.0
    %v368 = vadd.f32 %v367, 1e-05
    %v369 = vrsqrt.pop %v368
    %v370 = vmul.f32 %v369, %v368
    %v371 = vmul.f32 %v370, %v369
    %v372 = vmul.f32 0.5, %v371
    %v373 = vsub.f32 1.5, %v372
    %v374 = vmul.f32 %v369, %v373
    %vm375 = vweird.f32 %v368
    %vm376 = vweird.f32 %v369
    %vm377 = vmor %vm375, %vm376
    %v378 = vsel %vm377, %v369, %v374
    %v379 = vmul.f32 %v114, %v378
    %v380 = vmul.f32 %v342, %v379
    %v382 = vrot.slane %v380, 7
    %v384 = vsub.f32 %v114, %v382
    %v385 = vperm.slane %v379, 4
    %v386 = vmul.f32 %v306, %v385
    %v387 = vmul.f32 %v309, %v385
    %v388 = vmul.f32 %v312, %v385
    %v389 = vmul.f32 %v315, %v385
    %v390 = vmul.f32 %v318, %v385
    %v391 = vmul.f32 %v321, %v385
    %v392 = vmul.f32 %v324, %v385
    %v393 = vmul.f32 %v327, %v385
    %v394 = vperm.slane %v384, 5
    %v395 = vadd.f32 %v386, %v394
    %v396 = vadd.f32 %v387, %v394
    %v397 = vadd.f32 %v388, %v394
    %v398 = vadd.f32 %v389, %v394
    %v399 = vadd.f32 %v390, %v394
    %v400 = vadd.f32 %v391, %v394
    %v401 = vadd.f32 %v392, %v394
    %v402 = vadd.f32 %v393, %v394
    %v403 = vmax.f32 %v395, 0.0
    %v404 = vmax.f32 %v396, 0.0
    %v405 = vmax.f32 %v397, 0.0
    %v406 = vmax.f32 %v398, 0.0
    %v407 = vmax.f32 %v399, 0.0
    %v408 = vmax.f32 %v400, 0.0
    %v409 = vmax.f32 %v401, 0.0
    %v410 = vmax.f32 %v402, 0.0
    %v411 = vperm.slane %v114, 6
    %412 = vmatpush.msra.mxu0 %v162
    %413 = vmatpush.msra.mxu0 %v161
    %414 = vmatpush.msra.mxu0 %v160
    %415 = vmatpush.msra.mxu0 %v159
    %416 = vmatpush.msra.mxu0 %v158
    %417 = vmatpush.msra.mxu0 %v157
    %418 = vmatpush.msra.mxu0 %v156
    %419 = vmatpush.msra.mxu0 %v155
    %420 = vmatpush.msra.mxu0 %v154
    %421 = vmatpush.msra.mxu0 %v153
    %422 = vmatpush.msra.mxu0 %v152
    %423 = vmatpush.msra.mxu0 %v151
    %424 = vmatpush.msra.mxu0 %v150
    %425 = vmatpush.msra.mxu0 %v149
    %426 = vmatpush.msra.mxu0 %v148
    %427 = vmatpush.msra.mxu0 %v147
    %428 = vmatmul.f32.gmra.mxu0 %v403
    %v429 = vpop.f32.mrf.mxu0
    %v430 = vadd.f32 %v411, %v429
    %431 = vmatmul.f32.gmra.mxu0 %v404
    %v432 = vpop.f32.mrf.mxu0
    %v433 = vadd.f32 %v411, %v432
    %434 = vmatmul.f32.gmra.mxu0 %v405
    %v435 = vpop.f32.mrf.mxu0
    %v436 = vadd.f32 %v411, %v435
    %437 = vmatmul.f32.gmra.mxu0 %v406
    %v438 = vpop.f32.mrf.mxu0
    %v439 = vadd.f32 %v411, %v438
    %440 = vmatmul.f32.gmra.mxu0 %v407
    %v441 = vpop.f32.mrf.mxu0
    %v442 = vadd.f32 %v411, %v441
    %443 = vmatmul.f32.gmra.mxu0 %v408
    %v444 = vpop.f32.mrf.mxu0
    %v445 = vadd.f32 %v411, %v444
    %446 = vmatmul.f32.gmra.mxu0 %v409
    %v447 = vpop.f32.mrf.mxu0
    %v448 = vadd.f32 %v411, %v447
    %449 = vmatmul.f32.gmra.mxu0 %v410
    %v450 = vpop.f32.mrf.mxu0
    %v451 = vadd.f32 %v411, %v450
    %452 = vdwg.mxu0
    %453 = vst [vmem:[%s3] sm:$0xff] %v430
    %454 = vst [vmem:[%s3 + $0x8] sm:$0xff] %v433
    %455 = vst [vmem:[%s3 + $0x10] sm:$0xff] %v436
    %456 = vst [vmem:[%s3 + $0x18] sm:$0xff] %v439
    %457 = vst [vmem:[%s3 + $0x20] sm:$0xff] %v442
    %458 = vst [vmem:[%s3 + $0x28] sm:$0xff] %v445
    %459 = vst [vmem:[%s3 + $0x30] sm:$0xff] %v448
    %460 = vst [vmem:[%s3 + $0x38] sm:$0xff] %v451
    // Predicated region
    $region18: #{conditional_net_forward.1} parent=1 // pred_check
      _
    $region19: #{conditional_net_forward.1} parent=1 // pred_check_branch
      %462 = sbr.rel (0) target = $region21
    $region20: #{conditional_net_forward.1} parent=1 // pred_region
      _
    $region21: #{conditional_net_forward.1} parent=1 // pred_fallthru
      _
    // Predicated region
    $region22: #{conditional_net_forward.1} parent=1 // pred_check
      _
    $region23: #{conditional_net_forward.1} parent=1 // pred_check_branch
      %464 = sbr.rel (0) target = $region25
    $region24: #{conditional_net_forward.1} parent=1 // pred_region
      _
    $region25: #{conditional_net_forward.1} parent=1 // pred_fallthru
      _
    %465 = vsyncpa [#allocation3], 1

</llo_original>
